<compile_context>
chip_gen: v5e
topology: v5e:2x2
jax: 0.10.0
libtpu: 0.0.40
codegen_flags: <defaults>
</compile_context>

<pallas_src>
import jax
import jax.numpy as jnp
from jax.experimental import pallas as pl
from jax.experimental.pallas import tpu as pltpu


def _scale3_kernel(x_ref, o_ref):
    # Single VPU multiply per vreg; weak-typed 3 keeps the input dtype.
    o_ref[...] = x_ref[...] * 3


def dummy_model_forward(x: jax.Array) -> jax.Array:
    """Computes 3 * x via a Pallas TPU kernel. Works for any shape/rank."""
    orig_shape = x.shape
    n = x.size
    if n == 0:
        return x

    xf = x.reshape(-1)  # row-major flatten: no copy in XLA

    # Lane-dense factorization: columns are a large multiple of 128.
    lane = 128
    c = 1024
    if n < c:
        c = max(lane, ((n + lane - 1) // lane) * lane)
    n_pad = ((n + c - 1) // c) * c
    if n_pad != n:
        xf = jnp.pad(xf, (0, n_pad - n))          # single tail pad (<= c-1 elems)
    rows = n_pad // c
    x2 = xf.reshape(rows, c)

    # Row tile: ~2 MiB f32 blocks; for small inputs clamp to the full row count
    # so the block equals the array dims (no (8,128) divisibility issue).
    tr = min(512, rows)
    grid = (pl.cdiv(rows, tr),)

    itemsize = jnp.dtype(x.dtype).itemsize
    cost = pl.CostEstimate(
        flops=n, transcendentals=0, bytes_accessed=2 * n * itemsize
    )

    out = pl.pallas_call(
        _scale3_kernel,
        out_shape=jax.ShapeDtypeStruct((rows, c), x2.dtype),
        grid=grid,
        in_specs=[pl.BlockSpec((tr, c), lambda i: (i, 0))],
        out_specs=pl.BlockSpec((tr, c), lambda i: (i, 0)),
        compiler_params=pltpu.CompilerParams(
            dimension_semantics=("parallel",)
        ),
        cost_estimate=cost,
    )(x2)

    out = out.reshape(-1)
    if n_pad != n:
        out = out[:n]                             # single tail slice
    return out.reshape(orig_shape)


if __name__ == "__main__":
    key = jax.random.PRNGKey(0)
    # Small NCHW-shaped input consistent with typical serving tensors.
    x = jax.random.normal(key, (2, 4, 16, 16), dtype=jnp.float32)

    y = dummy_model_forward(x)
    jax.block_until_ready(y)

    ref = 3 * x
    assert y.shape == x.shape and y.dtype == x.dtype
    assert jnp.allclose(y, ref, atol=1e-6, rtol=1e-6)

    print("KERNEL_OK")
</pallas_src>

<mosaic_0001>
module attributes {stable_mosaic.version = 11 : i64} {
  func.func @_scale3_kernel(%arg0: i32, %arg1: memref<2x1024xf32, #tpu.memory_space<vmem>>, %arg2: memref<2x1024xf32, #tpu.memory_space<vmem>>) attributes {dimension_semantics = [#tpu.dimension_semantics<parallel>], iteration_bounds = array<i64: 1>, scalar_prefetch = 0 : i64, scratch_operands = 0 : i64, tpu.core_type = #tpu.core_type<tc>, window_params = [{transform_indices = @transform_0, window_bounds = array<i64: 2, 1024>}, {transform_indices = @transform_1, window_bounds = array<i64: 2, 1024>}]} {
    %c0 = arith.constant 0 : index
    %c0_0 = arith.constant 0 : index
    %0 = vector.load %arg1[%c0, %c0_0] : memref<2x1024xf32, #tpu.memory_space<vmem>>, vector<2x1024xf32>
    %cst = arith.constant 3.000000e+00 : f32
    %1 = vector.broadcast %cst : f32 to vector<2x1024xf32>
    %2 = arith.mulf %0, %1 : vector<2x1024xf32>
    %c0_1 = arith.constant 0 : index
    %c0_2 = arith.constant 0 : index
    %3 = vector.load %arg2[%c0_1, %c0_2] : memref<2x1024xf32, #tpu.memory_space<vmem>>, vector<2x1024xf32>
    tpu.vector_store %arg2[%c0_1, %c0_2], %2 {strides = array<i32>} : memref<2x1024xf32, #tpu.memory_space<vmem>>, vector<2x1024xf32>,
    return
  }
  func.func @transform_0(%arg0: i32) -> (i32, i32) {
    %c0_i32 = arith.constant 0 : i32
    %c0_i32_0 = arith.constant 0 : i32
    return %arg0, %c0_i32 : i32, i32
  }
  func.func @transform_1(%arg0: i32) -> (i32, i32) {
    %c0_i32 = arith.constant 0 : i32
    %c0_i32_0 = arith.constant 0 : i32
    return %arg0, %c0_i32 : i32, i32
  }
}

</mosaic_0001>

<llo_original>
// kernel: tpu_custom_call.1
$region0: #{tpu_custom_call.1}
  #allocation0 [shape = 'u32[]', space=smem, size = 0x4, offset = 0x4, fixed_abs, tag = 'smem constant byte address 0x4 - core index']
  #allocation1 [shape = 'u32[72,128]{1,0:T(1,128)}', space=vmem, size = 0x9000, scoped, tag = 'internal scratch']
  %s0 = inlined_call_operand.hbm [shape: f32[2,1024], index: 0, kind: input, shape index: {}]
  %s1 = inlined_call_operand.hbm [shape: f32[2,1024], index: 1, kind: output, shape index: {}]
  %s2 = sld [smem:[#allocation0]]
  $region18: #{tpu_custom_call.1} parent=0
    _
  %s4 = ssub.s32 1, %s2
  %s5 = scalar_select 0, %s4, %s2
  $region1: #{tpu_custom_call.1} parent=0
    #allocation2 [shape = 'u8[8192]{0}', space=vmem, size = 0x2000, scoped, tag = 'input window, operand 0, single buffered']
    #allocation3 [shape = 's32[1]{0}', space=sflag, size = 0x4, scoped, tag = 'scoped memory for tpu_custom_call.1']
    #allocation4 [shape = 's32[1]{0}', space=sflag, size = 0x4, scoped, tag = 'scoped memory for tpu_custom_call.1']
    #allocation5 [shape = 'u8[8192]{0}', space=vmem, size = 0x2000, scoped, tag = 'output window, operand 0, single buffered']
    %6 = vsyncpa [#allocation3], 0
    %7 = vsyncpa [#allocation4], 0
    // Predicated region
    $region2: #{tpu_custom_call.1} parent=1 // pred_check
      _
    $region3: #{tpu_custom_call.1} parent=1 // pred_check_branch
      %9 = sbr.rel (0) target = $region5
    $region4: #{tpu_custom_call.1} parent=1 // pred_region
      %11 = vsyncadd [#allocation3], 0
      %s13 = sshll.u32 %s0, 4
      %s14 = int_to_ptr.hbm [resolvable:$true] %s13
      %s15 = sshll.u32 [#allocation2], 4
      %s16 = int_to_ptr.vmem [resolvable:$true] %s15
      %18 = dma.hbm_to_vmem [thread:$0]  %s14, 256, %s16, [#allocation3]
    $region5: #{tpu_custom_call.1} parent=1 // pred_fallthru
      _
    // Predicated region
    $region6: #{tpu_custom_call.1} parent=1 // pred_check
      _
    $region7: #{tpu_custom_call.1} parent=1 // pred_check_branch
      %20 = sbr.rel (0) target = $region9
    $region8: #{tpu_custom_call.1} parent=1 // pred_region
      %22 = dma.done [#allocation3], 256
    $region9: #{tpu_custom_call.1} parent=1 // pred_fallthru
      _
    %v23 = vld [vmem:[#allocation2] sm:$0xff]
    %v24 = vld [vmem:[#allocation2 + $0x8] sm:$0xff]
    %v25 = vmul.f32 %v23, 3.0
    %v26 = vmul.f32 %v24, 3.0
    %27 = vst [vmem:[#allocation5] sm:$0xff] %v25
    %28 = vst [vmem:[#allocation5 + $0x8] sm:$0xff] %v26
    // Predicated region
    $region10: #{tpu_custom_call.1} parent=1 // pred_check
      _
    $region11: #{tpu_custom_call.1} parent=1 // pred_check_branch
      %30 = sbr.rel (0) target = $region13
    $region12: #{tpu_custom_call.1} parent=1 // pred_region
      %32 = vsyncadd [#allocation4], 0
      %s34 = sshll.u32 [#allocation5], 4
      %s35 = int_to_ptr.vmem [resolvable:$true] %s34
      %s36 = sshll.u32 %s1, 4
      %s37 = int_to_ptr.hbm [resolvable:$true] %s36
      %39 = dma.vmem_to_hbm [thread:$0]  %s35, 256, %s37, [#allocation4]
    $region13: #{tpu_custom_call.1} parent=1 // pred_fallthru
      _
    // Predicated region
    $region14: #{tpu_custom_call.1} parent=1 // pred_check
      _
    $region15: #{tpu_custom_call.1} parent=1 // pred_check_branch
      %41 = sbr.rel (0) target = $region17
    $region16: #{tpu_custom_call.1} parent=1 // pred_region
      %43 = dma.done [#allocation4], 256
    $region17: #{tpu_custom_call.1} parent=1 // pred_fallthru
      _
    %44 = vsyncpa [#allocation3], 1
    %45 = vsyncpa [#allocation4], 1

</llo_original>
